<compile_context>
chip_gen: v5e
topology: v5e:2x2
jax: 0.10.0
libtpu: 0.0.40
codegen_flags: <defaults>
</compile_context>

<pallas_src>
import functools

import jax
import jax.numpy as jnp
from jax.experimental import pallas as pl
from jax.experimental.pallas import tpu as pltpu


def student_kernel(x_ref, wt_ref, v_ref, o_ref, *, compute_dtype):
    # x_ref:  (tn, d) f32   — row tile of X, cast to bf16 here (in-kernel)
    # wt_ref: (d, m)  bf16  — full W.T (grid-invariant)
    # v_ref:  (1, m)  f32   — full output weights (grid-invariant)
    # o_ref:  (tn, 1) f32   — per-row outputs
    x = x_ref[...].astype(compute_dtype)
    # First matmul on the MXU with f32 accumulation: (tn, d) @ (d, m) -> (tn, m)
    h = jnp.dot(x, wt_ref[...], preferred_element_type=jnp.float32)
    h = jnp.maximum(h, 0.0)  # ReLU in f32
    # v-weighted reduction over m entirely in f32 on VPU (mul) + XLU (lane
    # reduce) — replaces the M=1 GEMV and the bf16 re-round of h.
    o_ref[...] = jnp.sum(h * v_ref[...], axis=1, keepdims=True)


def _round_up(x, n):
    return ((x + n - 1) // n) * n


def _pick_tn(n):
    """Lane-aligned batch tile: big steps, but >= 2 grid steps when possible
    so v7x's two TensorCores are both fed; capped at 1024 lanes."""
    n128 = _round_up(max(n, 1), 128)
    if n128 <= 128:
        return 128
    half = max(128, (n128 // 2) // 128 * 128)
    return min(1024, half)


@functools.partial(jax.jit, static_argnames=("tn", "compute_dtype"))
def student_forward(X, hidden_weights, output_weights, *, tn=None,
                    compute_dtype=jnp.bfloat16):
    """X: (N, d) f32, hidden_weights: (m, d), output_weights: (m,) -> (N,) f32."""
    N, d = X.shape
    m = hidden_weights.shape[0]
    if tn is None:
        tn = _pick_tn(N)
    assert tn % 128 == 0, "batch tile must be lane-aligned (multiple of 128)"

    n_pad = _round_up(N, tn)
    # Zero-pad batch rows only if needed (relu(0)*v sums to 0 and is sliced off).
    x = X if n_pad == N else jnp.pad(X, ((0, n_pad - N), (0, 0)))

    # Tiny one-time plumbing (m*d elements); X itself is untouched in HBM.
    wt = hidden_weights.T.astype(compute_dtype)            # (d, m)
    v = output_weights.reshape(1, m).astype(jnp.float32)   # (1, m), stays f32

    grid = (n_pad // tn,)
    cdt_size = jnp.dtype(compute_dtype).itemsize

    # Advisory cost estimate for XLA scheduling around the custom call.
    cost = pl.CostEstimate(
        flops=2 * n_pad * m * d + 3 * n_pad * m,
        transcendentals=0,
        bytes_accessed=(n_pad * d * X.dtype.itemsize
                        + d * m * cdt_size + m * 4 + n_pad * 4),
    )

    # Actual resident VMEM: double-buffered X tile / W / v / out + f32 h
    # staging, +25% headroom.  Only raise the limit beyond the default scoped
    # VMEM when required; cap well under v7x's 64 MiB physical VMEM.
    resident = (2 * tn * d * X.dtype.itemsize      # X tile, double-buffered
                + 2 * d * m * cdt_size             # W.T
                + 2 * m * 4                        # v
                + 2 * tn * 4                       # output tile
                + tn * m * 4)                      # f32 h staging
    resident = int(resident * 1.25)
    vmem_limit = None if resident <= 16 * 1024 * 1024 else min(resident,
                                                               40 * 1024 * 1024)

    out = pl.pallas_call(
        functools.partial(student_kernel, compute_dtype=compute_dtype),
        out_shape=jax.ShapeDtypeStruct((n_pad, 1), jnp.float32),
        grid=grid,
        in_specs=[
            pl.BlockSpec((tn, d), lambda i: (i, 0)),   # row tile of X (f32, HBM-direct)
            pl.BlockSpec((d, m), lambda i: (0, 0)),    # full W.T, grid-invariant
            pl.BlockSpec((1, m), lambda i: (0, 0)),    # full v, grid-invariant
        ],
        out_specs=pl.BlockSpec((tn, 1), lambda i: (i, 0)),
        compiler_params=pltpu.CompilerParams(
            dimension_semantics=("parallel",),
            vmem_limit_bytes=vmem_limit,
        ),
        cost_estimate=cost,
    )(x, wt, v)

    return out[:N, 0]


if __name__ == "__main__":
    # Small shapes consistent with the module (d=100 input dim, m hidden units).
    # N=512 -> tn=256 -> a 2-step parallel grid (feeds both v7x TensorCores).
    N, d, m = 512, 100, 128
    scale = 1.0

    key = jax.random.PRNGKey(0)
    kx, kw, kv = jax.random.split(key, 3)

    X = jax.random.normal(kx, (N, d), dtype=jnp.float32)
    hidden_weights = scale * jax.random.normal(kw, (m, d), dtype=jnp.float32)
    output_weights = scale * jax.random.normal(kv, (m,), dtype=jnp.float32)

    out = jax.block_until_ready(student_forward(X, hidden_weights, output_weights))

    # Reference mirroring the kernel arithmetic: bf16-rounded MXU operands,
    # everything else (ReLU, v-weighted reduction) in f32.  The hidden
    # activations are no longer re-rounded to bf16 (per review).
    Xb = X.astype(jnp.bfloat16).astype(jnp.float32)
    Wb = hidden_weights.astype(jnp.bfloat16).astype(jnp.float32)
    hidden_ref = jnp.maximum(Wb @ Xb.T, 0.0)                       # (m, N) f32
    ref = jnp.sum(output_weights[:, None] * hidden_ref, axis=0)    # (N,)   f32

    assert out.shape == (N,)
    max_err = float(jnp.max(jnp.abs(out - ref)))
    assert jnp.allclose(out, ref, atol=5e-2, rtol=2e-2), max_err

    print("KERNEL_OK")
</pallas_src>

<mosaic_0001>
module attributes {stable_mosaic.version = 11 : i64} {
  func.func @student_kernel(%arg0: i32, %arg1: memref<256x100xf32, #tpu.memory_space<vmem>>, %arg2: memref<100x128xbf16, #tpu.memory_space<vmem>>, %arg3: memref<1x128xf32, #tpu.memory_space<vmem>>, %arg4: memref<256x1xf32, #tpu.memory_space<vmem>>) attributes {dimension_semantics = [#tpu.dimension_semantics<parallel>], iteration_bounds = array<i64: 2>, scalar_prefetch = 0 : i64, scratch_operands = 0 : i64, tpu.core_type = #tpu.core_type<tc>, window_params = [{transform_indices = @transform_0, window_bounds = array<i64: 256, 100>}, {pipeline_mode = #tpu.pipeline_mode<synchronous>, transform_indices = @transform_1, window_bounds = array<i64: 100, 128>}, {pipeline_mode = #tpu.pipeline_mode<synchronous>, transform_indices = @transform_2, window_bounds = array<i64: 1, 128>}, {transform_indices = @transform_3, window_bounds = array<i64: 256, 1>}]} {
    %c0 = arith.constant 0 : index
    %c0_0 = arith.constant 0 : index
    %0 = vector.load %arg1[%c0, %c0_0] : memref<256x100xf32, #tpu.memory_space<vmem>>, vector<256x100xf32>
    %1 = arith.truncf %0 : vector<256x100xf32> to vector<256x100xbf16>
    %c0_1 = arith.constant 0 : index
    %c0_2 = arith.constant 0 : index
    %2 = vector.load %arg2[%c0_1, %c0_2] : memref<100x128xbf16, #tpu.memory_space<vmem>>, vector<100x128xbf16>
    %cst = arith.constant dense<0.000000e+00> : vector<256x128xf32>
    %3 = tpu.matmul %1, %2, %cst {dimension_numbers = #tpu.dot_dimension_numbers<[1], [0], [0], [1], [0, 0, 1, 1], [], []>} : vector<256x100xbf16>, vector<100x128xbf16>, vector<256x128xf32> -> vector<256x128xf32>
    %cst_3 = arith.constant 0.000000e+00 : f32
    %4 = vector.broadcast %cst_3 : f32 to vector<256x128xf32>
    %5 = arith.maximumf %3, %4 : vector<256x128xf32>
    %c0_4 = arith.constant 0 : index
    %c0_5 = arith.constant 0 : index
    %6 = vector.load %arg3[%c0_4, %c0_5] : memref<1x128xf32, #tpu.memory_space<vmem>>, vector<1x128xf32>
    %7 = vector.broadcast %6 : vector<1x128xf32> to vector<256x128xf32>
    %8 = arith.mulf %5, %7 : vector<256x128xf32>
    %cst_6 = arith.constant dense<0.000000e+00> : vector<256xf32>
    %9 = vector.multi_reduction <add>, %8, %cst_6 [1] : vector<256x128xf32> to vector<256xf32>
    %10 = vector.shape_cast %9 : vector<256xf32> to vector<256x1xf32>
    %c0_7 = arith.constant 0 : index
    %c0_8 = arith.constant 0 : index
    %11 = vector.load %arg4[%c0_7, %c0_8] : memref<256x1xf32, #tpu.memory_space<vmem>>, vector<256x1xf32>
    tpu.vector_store %arg4[%c0_7, %c0_8], %10 {strides = array<i32>} : memref<256x1xf32, #tpu.memory_space<vmem>>, vector<256x1xf32>,
    return
  }
  func.func @transform_0(%arg0: i32) -> (i32, i32) {
    %c0_i32 = arith.constant 0 : i32
    %c0_i32_0 = arith.constant 0 : i32
    return %arg0, %c0_i32 : i32, i32
  }
  func.func @transform_1(%arg0: i32) -> (i32, i32) {
    %c0_i32 = arith.constant 0 : i32
    %c0_i32_0 = arith.constant 0 : i32
    %c0_i32_1 = arith.constant 0 : i32
    return %c0_i32, %c0_i32_0 : i32, i32
  }
  func.func @transform_2(%arg0: i32) -> (i32, i32) {
    %c0_i32 = arith.constant 0 : i32
    %c0_i32_0 = arith.constant 0 : i32
    %c0_i32_1 = arith.constant 0 : i32
    return %c0_i32, %c0_i32_0 : i32, i32
  }
  func.func @transform_3(%arg0: i32) -> (i32, i32) {
    %c0_i32 = arith.constant 0 : i32
    %c0_i32_0 = arith.constant 0 : i32
    return %arg0, %c0_i32 : i32, i32
  }
}

</mosaic_0001>

<llo_original>
// kernel: student_forward.1
$region0: #{student_forward.1}
  #allocation0 [shape = 'u32[]', space=smem, size = 0x4, offset = 0x4, fixed_abs, tag = 'smem constant byte address 0x4 - core index']
  #allocation1 [shape = 'u32[72,128]{1,0:T(1,128)}', space=vmem, size = 0x9000, scoped, tag = 'internal scratch']
  %s0 = inlined_call_operand.vmem [shape: f32[512,100], index: 0, kind: input, shape index: {}]
  %s1 = inlined_call_operand.vmem [shape: bf16[100,128], index: 1, kind: input, shape index: {}]
  %s2 = inlined_call_operand.vmem [shape: f32[1,128], index: 2, kind: input, shape index: {}]
  %s3 = inlined_call_operand.vmem [shape: f32[512,1], index: 3, kind: output, shape index: {}]
  %s4 = sld [smem:[#allocation0]]
  $region45: #{student_forward.1} parent=0
    _
  %s6 = ssub.s32 1, %s4
  %s7 = scalar_select 0, %s6, %s4
  loop: start=0, step=1, limit=4
  $region2: #{student_forward.1} parent=0 // loop_pre_header
    _
  $region3: #{student_forward.1} parent=0 // loop_header
    %s9 = sphi 0, %s13
    %p10 = scmp.ge.s32.totalorder %s9, 4
    %s19 = sphi 0, %s21
    %s22 = sphi 0, %s19
    %s23 = sphi 0, %s22
    %s39 = sphi 0, %s23
    %s43 = sphi 0, %s43
    %s45 = sphi 0, %s43
    %s46 = sphi 0, %s45
    %s60 = sphi 0, %s46
    %s64 = sphi 0, %s64
    %s66 = sphi 0, %s64
    %s67 = sphi 0, %s66
    %s81 = sphi 0, %s67
    %s87 = sphi 0, %s89
    %s90 = sphi 0, %s87
    %s91 = sphi 0, %s90
    %s107 = sphi 0, %s91
  $region4: #{student_forward.1} parent=0 // loop_header_branch
    %12 = sbr.rel (%p10) target = $region8
  $region5: #{student_forward.1} parent=0 // loop_body
    %s14 = ssub.s32 %s9, 1
    %s15 = ssub.s32 %s9, 2
    %s16 = sadd.s32 %s9, 1
    %s17 = ssub.s32 %s9, %s16
    %p18 = scmp.eq.s32.totalorder %s17, 0
    %s20 = sadd.s32 %s19, 1
    %s21 = scalar_select %p18, %s19, %s20
    %p24 = pneg %p18
    %p25 = scmp.eq.s32.totalorder %s9, 1
    %p26 = por %p24, %p25
    %p27 = scmp.ne.s32.totalorder %s19, %s22
    %p28 = scmp.eq.s32.totalorder %s9, 0
    %p29 = por %p27, %p28
    %p30 = scmp.ne.s32.totalorder %s19, %s22
    %p31 = scmp.eq.s32.totalorder %s14, 1
    %p32 = por %p30, %p31
    %p33 = scmp.ne.s32.totalorder %s22, %s23
    %p34 = scmp.eq.s32.totalorder %s14, 0
    %p35 = por %p33, %p34
    %p36 = scmp.ne.s32.totalorder %s22, %s23
    %p37 = scmp.eq.s32.totalorder %s15, 1
    %p38 = por %p36, %p37
    %p40 = scmp.ne.s32.totalorder %s23, %s39
    %p41 = scmp.eq.s32.totalorder %s15, 0
    %p42 = por %p40, %p41
    %s44 = sadd.s32 %s43, 1
    %p47 = scmp.eq.s32.totalorder %s9, 1
    %p48 = scmp.ne.s32.totalorder %s43, %s45
    %p49 = scmp.eq.s32.totalorder %s9, 0
    %p50 = por %p48, %p49
    %p51 = scmp.ne.s32.totalorder %s43, %s45
    %p52 = scmp.eq.s32.totalorder %s14, 1
    %p53 = por %p51, %p52
    %p54 = scmp.ne.s32.totalorder %s45, %s46
    %p55 = scmp.eq.s32.totalorder %s14, 0
    %p56 = por %p54, %p55
    %p57 = scmp.ne.s32.totalorder %s45, %s46
    %p58 = scmp.eq.s32.totalorder %s15, 1
    %p59 = por %p57, %p58
    %p61 = scmp.ne.s32.totalorder %s46, %s60
    %p62 = scmp.eq.s32.totalorder %s15, 0
    %p63 = por %p61, %p62
    %s65 = sadd.s32 %s64, 1
    %p68 = scmp.eq.s32.totalorder %s9, 1
    %p69 = scmp.ne.s32.totalorder %s64, %s66
    %p70 = scmp.eq.s32.totalorder %s9, 0
    %p71 = por %p69, %p70
    %p72 = scmp.ne.s32.totalorder %s64, %s66
    %p73 = scmp.eq.s32.totalorder %s14, 1
    %p74 = por %p72, %p73
    %p75 = scmp.ne.s32.totalorder %s66, %s67
    %p76 = scmp.eq.s32.totalorder %s14, 0
    %p77 = por %p75, %p76
    %p78 = scmp.ne.s32.totalorder %s66, %s67
    %p79 = scmp.eq.s32.totalorder %s15, 1
    %p80 = por %p78, %p79
    %p82 = scmp.ne.s32.totalorder %s67, %s81
    %p83 = scmp.eq.s32.totalorder %s15, 0
    %p84 = por %p82, %p83
    %s85 = ssub.s32 %s9, %s16
    %p86 = scmp.eq.s32.totalorder %s85, 0
    %s88 = sadd.s32 %s87, 1
    %s89 = scalar_select %p86, %s87, %s88
    %p92 = pneg %p86
    %p93 = scmp.eq.s32.totalorder %s9, 1
    %p94 = por %p92, %p93
    %p95 = scmp.ne.s32.totalorder %s87, %s90
    %p96 = scmp.eq.s32.totalorder %s9, 0
    %p97 = por %p95, %p96
    %p98 = scmp.ne.s32.totalorder %s87, %s90
    %p99 = scmp.eq.s32.totalorder %s14, 1
    %p100 = por %p98, %p99
    %p101 = scmp.ne.s32.totalorder %s90, %s91
    %p102 = scmp.eq.s32.totalorder %s14, 0
    %p103 = por %p101, %p102
    %p104 = scmp.ne.s32.totalorder %s90, %s91
    %p105 = scmp.eq.s32.totalorder %s15, 1
    %p106 = por %p104, %p105
    %p108 = scmp.ne.s32.totalorder %s91, %s107
    %p109 = scmp.eq.s32.totalorder %s15, 0
    %p110 = por %p108, %p109
    %p111 = scmp.le.s32.totalorder 1, %s9
    %p112 = scmp.lt.s32.totalorder %s9, 3
    %p113 = pnand %p111, %p112
    %p114 = pneg %p113
    // Predicated region
    $region9: #{student_forward.1} parent=5 // pred_check
      _
    $region10: #{student_forward.1} parent=5 // pred_check_branch
      %116 = sbr.rel (%p113) target = $region12
    $region11: #{student_forward.1} parent=5 // pred_region
      %s117 = ssub.s32 %s9, 1
      // Predicated region
      $region13: #{student_forward.1} parent=11 // pred_check
        %p118 = pneg %p56
      $region14: #{student_forward.1} parent=11 // pred_check_branch
        %120 = sbr.rel (%p118) target = $region16
      $region15: #{student_forward.1} parent=11 // pred_region
        _
      $region16: #{student_forward.1} parent=11 // pred_fallthru
        _
      // Predicated region
      $region17: #{student_forward.1} parent=11 // pred_check
        %p121 = pneg %p77
      $region18: #{student_forward.1} parent=11 // pred_check_branch
        %123 = sbr.rel (%p121) target = $region20
      $region19: #{student_forward.1} parent=11 // pred_region
        _
      $region20: #{student_forward.1} parent=11 // pred_fallthru
        _
    $region12: #{student_forward.1} parent=5 // pred_fallthru
      _
    %p124 = scmp.lt.s32.totalorder %s9, 2
    // Predicated region
    $region21: #{student_forward.1} parent=5 // pred_check
      %p125 = pneg %p124
    $region22: #{student_forward.1} parent=5 // pred_check_branch
      %127 = sbr.rel (%p125) target = $region24
    $region23: #{student_forward.1} parent=5 // pred_region
      // Predicated region
      $region25: #{student_forward.1} parent=23 // pred_check
        %p128 = pneg %p29
      $region26: #{student_forward.1} parent=23 // pred_check_branch
        %130 = sbr.rel (%p128) target = $region28
      $region27: #{student_forward.1} parent=23 // pred_region
        %s131 = smul.u32 32, %s9
        %p132 = scmp.lt.s32.totalorder %s131, 63
        %s133 = scalar_select %p132, %s131, 63
        %s134 = smul.addr %s133, 8
        %s135 = scalar_lea.vmem %s0, %s134
        %s136 = smul.u32 32, %s9
      $region28: #{student_forward.1} parent=23 // pred_fallthru
        _
    $region24: #{student_forward.1} parent=5 // pred_fallthru
      _
    %p137 = scmp.le.s32.totalorder 1, %s9
    %p138 = scmp.lt.s32.totalorder %s9, 3
    %p139 = pnand %p137, %p138
    %p140 = pneg %p139
    // Predicated region
    $region29: #{student_forward.1} parent=5 // pred_check
      _
    $region30: #{student_forward.1} parent=5 // pred_check_branch
      %142 = sbr.rel (%p139) target = $region32
    $region31: #{student_forward.1} parent=5 // pred_region
      %s143 = ssub.s32 %s9, 1
      %s144 = smul.u32 32, %s14
      %p145 = scmp.lt.s32.totalorder %s144, 63
      %s146 = scalar_select %p145, %s144, 63
      %s147 = smul.addr %s146, 8
      %s148 = scalar_lea.vmem %s0, %s147
      %p149 = pneg %p35
      %p150 = pneg %p32
      %p151 = pneg %p56
      %p152 = pneg %p53
      %p153 = pneg %p77
      %p154 = pneg %p74
      %p155 = pneg %p103
      %p156 = pneg %p100
      %s157 = smul.u32 32, %s14
      %p158 = scmp.lt.s32.totalorder %s157, 63
      %s159 = scalar_select %p158, %s157, 63
      %s160 = smul.addr %s159, 8
      %s161 = scalar_lea.vmem %s3, %s160
      %s162 = smul.u32 32, %s14
      %p163 = scmp.lt.s32.totalorder %s162, 63
      %s164 = scalar_select %p163, %s162, 63
      %s165 = smul.addr %s164, 8
      %s166 = scalar_lea.vmem %s0, %s165
      %s167 = smul.u32 32, %s14
      %s168 = smul.u32 32, %s14
      %p169 = scmp.lt.s32.totalorder %s168, 63
      %s170 = scalar_select %p169, %s168, 63
      %s171 = smul.addr %s170, 8
      %s172 = scalar_lea.vmem %s3, %s171
      %s173 = smul.u32 32, %s14
      %v175 = vld [vmem:[%s166] sm:$0xff]
      %v176 = vld [vmem:[%s166 + $0x8] sm:$0xff]
      %v177 = vld [vmem:[%s166 + $0x10] sm:$0xff]
      %v178 = vld [vmem:[%s166 + $0x18] sm:$0xff]
      %v179 = vld [vmem:[%s166 + $0x20] sm:$0xff]
      %v180 = vld [vmem:[%s166 + $0x28] sm:$0xff]
      %v181 = vld [vmem:[%s166 + $0x30] sm:$0xff]
      %v182 = vld [vmem:[%s166 + $0x38] sm:$0xff]
      %v183 = vld [vmem:[%s166 + $0x40] sm:$0xff]
      %v184 = vld [vmem:[%s166 + $0x48] sm:$0xff]
      %v185 = vld [vmem:[%s166 + $0x50] sm:$0xff]
      %v186 = vld [vmem:[%s166 + $0x58] sm:$0xff]
      %v187 = vld [vmem:[%s166 + $0x60] sm:$0xff]
      %v188 = vld [vmem:[%s166 + $0x68] sm:$0xff]
      %v189 = vld [vmem:[%s166 + $0x70] sm:$0xff]
      %v190 = vld [vmem:[%s166 + $0x78] sm:$0xff]
      %v191 = vld [vmem:[%s166 + $0x80] sm:$0xff]
      %v192 = vld [vmem:[%s166 + $0x88] sm:$0xff]
      %v193 = vld [vmem:[%s166 + $0x90] sm:$0xff]
      %v194 = vld [vmem:[%s166 + $0x98] sm:$0xff]
      %v195 = vld [vmem:[%s166 + $0xa0] sm:$0xff]
      %v196 = vld [vmem:[%s166 + $0xa8] sm:$0xff]
      %v197 = vld [vmem:[%s166 + $0xb0] sm:$0xff]
      %v198 = vld [vmem:[%s166 + $0xb8] sm:$0xff]
      %v199 = vld [vmem:[%s166 + $0xc0] sm:$0xff]
      %v200 = vld [vmem:[%s166 + $0xc8] sm:$0xff]
      %v201 = vld [vmem:[%s166 + $0xd0] sm:$0xff]
      %v202 = vld [vmem:[%s166 + $0xd8] sm:$0xff]
      %v203 = vld [vmem:[%s166 + $0xe0] sm:$0xff]
      %v204 = vld [vmem:[%s166 + $0xe8] sm:$0xff]
      %v205 = vld [vmem:[%s166 + $0xf0] sm:$0xff]
      %v206 = vld [vmem:[%s166 + $0xf8] sm:$0xff]
      %v207 = vpack.c.bf16 %v176, %v175
      %v208 = vpack.c.bf16 %v178, %v177
      %v209 = vpack.c.bf16 %v180, %v179
      %v210 = vpack.c.bf16 %v182, %v181
      %v211 = vpack.c.bf16 %v184, %v183
      %v212 = vpack.c.bf16 %v186, %v185
      %v213 = vpack.c.bf16 %v188, %v187
      %v214 = vpack.c.bf16 %v190, %v189
      %v215 = vpack.c.bf16 %v192, %v191
      %v216 = vpack.c.bf16 %v194, %v193
      %v217 = vpack.c.bf16 %v196, %v195
      %v218 = vpack.c.bf16 %v198, %v197
      %v219 = vpack.c.bf16 %v200, %v199
      %v220 = vpack.c.bf16 %v202, %v201
      %v221 = vpack.c.bf16 %v204, %v203
      %v222 = vpack.c.bf16 %v206, %v205
      %v223 = vld [vmem:[%s1] sm:$0xf]
      %v224 = vld [vmem:[%s1 + $0x4] sm:$0xf]
      %v225 = vld [vmem:[%s1 + $0x8] sm:$0xf]
      %v226 = vld [vmem:[%s1 + $0xc] sm:$0xf]
      %v227 = vld [vmem:[%s1 + $0x10] sm:$0xf]
      %v228 = vld [vmem:[%s1 + $0x14] sm:$0xf]
      %v229 = vld [vmem:[%s1 + $0x18] sm:$0xf]
      %v230 = vld [vmem:[%s1 + $0x1c] sm:$0xf]
      %v231 = vld [vmem:[%s1 + $0x20] sm:$0xf]
      %v232 = vld [vmem:[%s1 + $0x24] sm:$0xf]
      %v233 = vld [vmem:[%s1 + $0x28] sm:$0xf]
      %v234 = vld [vmem:[%s1 + $0x2c] sm:$0xf]
      %v235 = vld [vmem:[%s1 + $0x30] sm:$0x3]
      %v249 = vunpack.c.l.b16 %v223
      %v250 = vunpack.c.l.b16 %v224
      %v251 = vunpack.c.l.b16 %v225
      %v252 = vunpack.c.l.b16 %v226
      %v253 = vunpack.c.l.b16 %v227
      %v254 = vunpack.c.l.b16 %v228
      %v255 = vunpack.c.l.b16 %v229
      %v256 = vunpack.c.l.b16 %v230
      %v257 = vunpack.c.l.b16 %v231
      %v258 = vunpack.c.l.b16 %v232
      %v259 = vunpack.c.l.b16 %v233
      %v260 = vunpack.c.l.b16 %v234
      %v261 = vunpack.c.l.b16 %v235
      %v262 = vpack.c.b16 %v250, %v249
      %v263 = vpack.c.b16 %v252, %v251
      %v264 = vpack.c.b16 %v254, %v253
      %v265 = vpack.c.b16 %v256, %v255
      %v266 = vpack.c.b16 %v258, %v257
      %v267 = vpack.c.b16 %v260, %v259
      %v268 = vpack.c.b16 %v261, %v261
      %vm275 = vcmask 818176
      %v277 = vsel %vm275, %v207, 0
      %v280 = vsel %vm275, %v208, 0
      %v283 = vsel %vm275, %v209, 0
      %v286 = vsel %vm275, %v210, 0
      %v289 = vsel %vm275, %v211, 0
      %v292 = vsel %vm275, %v212, 0
      %v295 = vsel %vm275, %v213, 0
      %v298 = vsel %vm275, %v214, 0
      %v301 = vsel %vm275, %v215, 0
      %v304 = vsel %vm275, %v216, 0
      %v307 = vsel %vm275, %v217, 0
      %v310 = vsel %vm275, %v218, 0
      %v313 = vsel %vm275, %v219, 0
      %v316 = vsel %vm275, %v220, 0
      %v319 = vsel %vm275, %v221, 0
      %v322 = vsel %vm275, %v222, 0
      %vm324 = vcmask 1041408
      %v326 = vsel %vm324, %v268, 0
      %328 = vmatpush.bf16.msra.mxu0 0
      %329 = vmatpush.bf16.msra.mxu0 %v326
      %330 = vmatpush.bf16.msra.mxu0 %v267
      %331 = vmatpush.bf16.msra.mxu0 %v266
      %332 = vmatpush.bf16.msra.mxu0 %v265
      %333 = vmatpush.bf16.msra.mxu0 %v264
      %334 = vmatpush.bf16.msra.mxu0 %v263
      %335 = vmatpush.bf16.msra.mxu0 %v262
      %336 = vmatmul.bf16.gmra.mxu0 %v277
      %v337 = vpop.f32.mrf.mxu0
      %v338 = vadd.f32 0.0, %v337
      %v339 = vpop.f32.mrf.mxu0
      %v340 = vadd.f32 0.0, %v339
      %341 = vmatmul.bf16.gmra.mxu0 %v280
      %v342 = vpop.f32.mrf.mxu0
      %v343 = vadd.f32 0.0, %v342
      %v344 = vpop.f32.mrf.mxu0
      %v345 = vadd.f32 0.0, %v344
      %346 = vmatmul.bf16.gmra.mxu0 %v283
      %v347 = vpop.f32.mrf.mxu0
      %v348 = vadd.f32 0.0, %v347
      %v349 = vpop.f32.mrf.mxu0
      %v350 = vadd.f32 0.0, %v349
      %351 = vmatmul.bf16.gmra.mxu0 %v286
      %v352 = vpop.f32.mrf.mxu0
      %v353 = vadd.f32 0.0, %v352
      %v354 = vpop.f32.mrf.mxu0
      %v355 = vadd.f32 0.0, %v354
      %356 = vmatmul.bf16.gmra.mxu0 %v289
      %v357 = vpop.f32.mrf.mxu0
      %v358 = vadd.f32 0.0, %v357
      %v359 = vpop.f32.mrf.mxu0
      %v360 = vadd.f32 0.0, %v359
      %361 = vmatmul.bf16.gmra.mxu0 %v292
      %v362 = vpop.f32.mrf.mxu0
      %v363 = vadd.f32 0.0, %v362
      %v364 = vpop.f32.mrf.mxu0
      %v365 = vadd.f32 0.0, %v364
      %366 = vmatmul.bf16.gmra.mxu0 %v295
      %v367 = vpop.f32.mrf.mxu0
      %v368 = vadd.f32 0.0, %v367
      %v369 = vpop.f32.mrf.mxu0
      %v370 = vadd.f32 0.0, %v369
      %371 = vmatmul.bf16.gmra.mxu0 %v298
      %v372 = vpop.f32.mrf.mxu0
      %v373 = vadd.f32 0.0, %v372
      %v374 = vpop.f32.mrf.mxu0
      %v375 = vadd.f32 0.0, %v374
      %376 = vmatmul.bf16.gmra.mxu0 %v301
      %v377 = vpop.f32.mrf.mxu0
      %v378 = vadd.f32 0.0, %v377
      %v379 = vpop.f32.mrf.mxu0
      %v380 = vadd.f32 0.0, %v379
      %381 = vmatmul.bf16.gmra.mxu0 %v304
      %v382 = vpop.f32.mrf.mxu0
      %v383 = vadd.f32 0.0, %v382
      %v384 = vpop.f32.mrf.mxu0
      %v385 = vadd.f32 0.0, %v384
      %386 = vmatmul.bf16.gmra.mxu0 %v307
      %v387 = vpop.f32.mrf.mxu0
      %v388 = vadd.f32 0.0, %v387
      %v389 = vpop.f32.mrf.mxu0
      %v390 = vadd.f32 0.0, %v389
      %391 = vmatmul.bf16.gmra.mxu0 %v310
      %v392 = vpop.f32.mrf.mxu0
      %v393 = vadd.f32 0.0, %v392
      %v394 = vpop.f32.mrf.mxu0
      %v395 = vadd.f32 0.0, %v394
      %396 = vmatmul.bf16.gmra.mxu0 %v313
      %v397 = vpop.f32.mrf.mxu0
      %v398 = vadd.f32 0.0, %v397
      %v399 = vpop.f32.mrf.mxu0
      %v400 = vadd.f32 0.0, %v399
      %401 = vmatmul.bf16.gmra.mxu0 %v316
      %v402 = vpop.f32.mrf.mxu0
      %v403 = vadd.f32 0.0, %v402
      %v404 = vpop.f32.mrf.mxu0
      %v405 = vadd.f32 0.0, %v404
      %406 = vmatmul.bf16.gmra.mxu0 %v319
      %v407 = vpop.f32.mrf.mxu0
      %v408 = vadd.f32 0.0, %v407
      %v409 = vpop.f32.mrf.mxu0
      %v410 = vadd.f32 0.0, %v409
      %411 = vmatmul.bf16.gmra.mxu0 %v322
      %v412 = vpop.f32.mrf.mxu0
      %v413 = vadd.f32 0.0, %v412
      %v414 = vpop.f32.mrf.mxu0
      %v415 = vadd.f32 0.0, %v414
      %416 = vdwg.mxu0
      %v417 = vmax.f32 %v338, 0.0
      %v418 = vmax.f32 %v340, 0.0
      %v419 = vmax.f32 %v343, 0.0
      %v420 = vmax.f32 %v345, 0.0
      %v421 = vmax.f32 %v348, 0.0
      %v422 = vmax.f32 %v350, 0.0
      %v423 = vmax.f32 %v353, 0.0
      %v424 = vmax.f32 %v355, 0.0
      %v425 = vmax.f32 %v358, 0.0
      %v426 = vmax.f32 %v360, 0.0
      %v427 = vmax.f32 %v363, 0.0
      %v428 = vmax.f32 %v365, 0.0
      %v429 = vmax.f32 %v368, 0.0
      %v430 = vmax.f32 %v370, 0.0
      %v431 = vmax.f32 %v373, 0.0
      %v432 = vmax.f32 %v375, 0.0
      %v433 = vmax.f32 %v378, 0.0
      %v434 = vmax.f32 %v380, 0.0
      %v435 = vmax.f32 %v383, 0.0
      %v436 = vmax.f32 %v385, 0.0
      %v437 = vmax.f32 %v388, 0.0
      %v438 = vmax.f32 %v390, 0.0
      %v439 = vmax.f32 %v393, 0.0
      %v440 = vmax.f32 %v395, 0.0
      %v441 = vmax.f32 %v398, 0.0
      %v442 = vmax.f32 %v400, 0.0
      %v443 = vmax.f32 %v403, 0.0
      %v444 = vmax.f32 %v405, 0.0
      %v445 = vmax.f32 %v408, 0.0
      %v446 = vmax.f32 %v410, 0.0
      %v447 = vmax.f32 %v413, 0.0
      %v448 = vmax.f32 %v415, 0.0
      %v449 = vld [vmem:[%s2] sm:$0x1]
      %v451 = vperm.slane %v449, 0
      %v453 = vmul.f32 %v417, %v451
      %v454 = vmul.f32 %v418, %v451
      %v455 = vmul.f32 %v419, %v451
      %v456 = vmul.f32 %v420, %v451
      %v457 = vmul.f32 %v421, %v451
      %v458 = vmul.f32 %v422, %v451
      %v459 = vmul.f32 %v423, %v451
      %v460 = vmul.f32 %v424, %v451
      %v461 = vmul.f32 %v425, %v451
      %v462 = vmul.f32 %v426, %v451
      %v463 = vmul.f32 %v427, %v451
      %v464 = vmul.f32 %v428, %v451
      %v465 = vmul.f32 %v429, %v451
      %v466 = vmul.f32 %v430, %v451
      %v467 = vmul.f32 %v431, %v451
      %v468 = vmul.f32 %v432, %v451
      %v469 = vmul.f32 %v433, %v451
      %v470 = vmul.f32 %v434, %v451
      %v471 = vmul.f32 %v435, %v451
      %v472 = vmul.f32 %v436, %v451
      %v473 = vmul.f32 %v437, %v451
      %v474 = vmul.f32 %v438, %v451
      %v475 = vmul.f32 %v439, %v451
      %v476 = vmul.f32 %v440, %v451
      %v477 = vmul.f32 %v441, %v451
      %v478 = vmul.f32 %v442, %v451
      %v479 = vmul.f32 %v443, %v451
      %v480 = vmul.f32 %v444, %v451
      %v481 = vmul.f32 %v445, %v451
      %v482 = vmul.f32 %v446, %v451
      %v483 = vmul.f32 %v447, %v451
      %v484 = vmul.f32 %v448, %v451
      %485 = vadd.xlane.f32.xlu0 %v453
      %v486 = vpop.xlane.xlu0 %485
      %487 = vadd.xlane.f32.xlu0 %v454
      %v488 = vpop.xlane.xlu0 %487
      %489 = vadd.xlane.f32.xlu0 %v455
      %v490 = vpop.xlane.xlu0 %489
      %491 = vadd.xlane.f32.xlu0 %v456
      %v492 = vpop.xlane.xlu0 %491
      %493 = vadd.xlane.f32.xlu0 %v457
      %v494 = vpop.xlane.xlu0 %493
      %495 = vadd.xlane.f32.xlu0 %v458
      %v496 = vpop.xlane.xlu0 %495
      %497 = vadd.xlane.f32.xlu0 %v459
      %v498 = vpop.xlane.xlu0 %497
      %499 = vadd.xlane.f32.xlu0 %v460
      %v500 = vpop.xlane.xlu0 %499
      %501 = vadd.xlane.f32.xlu0 %v461
      %v502 = vpop.xlane.xlu0 %501
      %503 = vadd.xlane.f32.xlu0 %v462
      %v504 = vpop.xlane.xlu0 %503
      %505 = vadd.xlane.f32.xlu0 %v463
      %v506 = vpop.xlane.xlu0 %505
      %507 = vadd.xlane.f32.xlu0 %v464
      %v508 = vpop.xlane.xlu0 %507
      %509 = vadd.xlane.f32.xlu0 %v465
      %v510 = vpop.xlane.xlu0 %509
      %511 = vadd.xlane.f32.xlu0 %v466
      %v512 = vpop.xlane.xlu0 %511
      %513 = vadd.xlane.f32.xlu0 %v467
      %v514 = vpop.xlane.xlu0 %513
      %515 = vadd.xlane.f32.xlu0 %v468
      %v516 = vpop.xlane.xlu0 %515
      %517 = vadd.xlane.f32.xlu0 %v469
      %v518 = vpop.xlane.xlu0 %517
      %519 = vadd.xlane.f32.xlu0 %v470
      %v520 = vpop.xlane.xlu0 %519
      %521 = vadd.xlane.f32.xlu0 %v471
      %v522 = vpop.xlane.xlu0 %521
      %523 = vadd.xlane.f32.xlu0 %v472
      %v524 = vpop.xlane.xlu0 %523
      %525 = vadd.xlane.f32.xlu0 %v473
      %v526 = vpop.xlane.xlu0 %525
      %527 = vadd.xlane.f32.xlu0 %v474
      %v528 = vpop.xlane.xlu0 %527
      %529 = vadd.xlane.f32.xlu0 %v475
      %v530 = vpop.xlane.xlu0 %529
      %531 = vadd.xlane.f32.xlu0 %v476
      %v532 = vpop.xlane.xlu0 %531
      %533 = vadd.xlane.f32.xlu0 %v477
      %v534 = vpop.xlane.xlu0 %533
      %535 = vadd.xlane.f32.xlu0 %v478
      %v536 = vpop.xlane.xlu0 %535
      %537 = vadd.xlane.f32.xlu0 %v479
      %v538 = vpop.xlane.xlu0 %537
      %539 = vadd.xlane.f32.xlu0 %v480
      %v540 = vpop.xlane.xlu0 %539
      %541 = vadd.xlane.f32.xlu0 %v481
      %v542 = vpop.xlane.xlu0 %541
      %543 = vadd.xlane.f32.xlu0 %v482
      %v544 = vpop.xlane.xlu0 %543
      %545 = vadd.xlane.f32.xlu0 %v483
      %v546 = vpop.xlane.xlu0 %545
      %547 = vadd.xlane.f32.xlu0 %v484
      %v548 = vpop.xlane.xlu0 %547
      %vm549 = vcmask 7168
      %550 = vst.msk [vmem:[%s172] sm:$0xff] %vm549, %v486
      %551 = vst.msk [vmem:[%s172 + $0x8] sm:$0xff] %vm549, %v488
      %552 = vst.msk [vmem:[%s172 + $0x10] sm:$0xff] %vm549, %v490
      %553 = vst.msk [vmem:[%s172 + $0x18] sm:$0xff] %vm549, %v492
      %554 = vst.msk [vmem:[%s172 + $0x20] sm:$0xff] %vm549, %v494
      %555 = vst.msk [vmem:[%s172 + $0x28] sm:$0xff] %vm549, %v496
      %556 = vst.msk [vmem:[%s172 + $0x30] sm:$0xff] %vm549, %v498
      %557 = vst.msk [vmem:[%s172 + $0x38] sm:$0xff] %vm549, %v500
      %558 = vst.msk [vmem:[%s172 + $0x40] sm:$0xff] %vm549, %v502
      %559 = vst.msk [vmem:[%s172 + $0x48] sm:$0xff] %vm549, %v504
      %560 = vst.msk [vmem:[%s172 + $0x50] sm:$0xff] %vm549, %v506
      %561 = vst.msk [vmem:[%s172 + $0x58] sm:$0xff] %vm549, %v508
      %562 = vst.msk [vmem:[%s172 + $0x60] sm:$0xff] %vm549, %v510
      %563 = vst.msk [vmem:[%s172 + $0x68] sm:$0xff] %vm549, %v512
      %564 = vst.msk [vmem:[%s172 + $0x70] sm:$0xff] %vm549, %v514
      %565 = vst.msk [vmem:[%s172 + $0x78] sm:$0xff] %vm549, %v516
      %566 = vst.msk [vmem:[%s172 + $0x80] sm:$0xff] %vm549, %v518
      %567 = vst.msk [vmem:[%s172 + $0x88] sm:$0xff] %vm549, %v520
      %568 = vst.msk [vmem:[%s172 + $0x90] sm:$0xff] %vm549, %v522
      %569 = vst.msk [vmem:[%s172 + $0x98] sm:$0xff] %vm549, %v524
      %570 = vst.msk [vmem:[%s172 + $0xa0] sm:$0xff] %vm549, %v526
      %571 = vst.msk [vmem:[%s172 + $0xa8] sm:$0xff] %vm549, %v528
      %572 = vst.msk [vmem:[%s172 + $0xb0] sm:$0xff] %vm549, %v530
      %573 = vst.msk [vmem:[%s172 + $0xb8] sm:$0xff] %vm549, %v532
      %574 = vst.msk [vmem:[%s172 + $0xc0] sm:$0xff] %vm549, %v534
      %575 = vst.msk [vmem:[%s172 + $0xc8] sm:$0xff] %vm549, %v536
      %576 = vst.msk [vmem:[%s172 + $0xd0] sm:$0xff] %vm549, %v538
      %577 = vst.msk [vmem:[%s172 + $0xd8] sm:$0xff] %vm549, %v540
      %578 = vst.msk [vmem:[%s172 + $0xe0] sm:$0xff] %vm549, %v542
      %579 = vst.msk [vmem:[%s172 + $0xe8] sm:$0xff] %vm549, %v544
      %580 = vst.msk [vmem:[%s172 + $0xf0] sm:$0xff] %vm549, %v546
      %581 = vst.msk [vmem:[%s172 + $0xf8] sm:$0xff] %vm549, %v548
      %s582 = smul.u32 32, %s14
      %p583 = scmp.lt.s32.totalorder %s582, 63
      %s584 = scalar_select %p583, %s582, 63
      %s585 = smul.addr %s584, 8
      %s586 = scalar_lea.vmem %s3, %s585
      // Predicated region
      $region33: #{student_forward.1} parent=31 // pred_check
        %p587 = pneg %p100
      $region34: #{student_forward.1} parent=31 // pred_check_branch
        %589 = sbr.rel (%p587) target = $region36
      $region35: #{student_forward.1} parent=31 // pred_region
        %s590 = smul.u32 32, %s14
      $region36: #{student_forward.1} parent=31 // pred_fallthru
        _
    $region32: #{student_forward.1} parent=5 // pred_fallthru
      _
    %p591 = scmp.le.s32.totalorder 2, %s9
    // Predicated region
    $region37: #{student_forward.1} parent=5 // pred_check
      %p592 = pneg %p591
    $region38: #{student_forward.1} parent=5 // pred_check_branch
      %594 = sbr.rel (%p592) target = $region40
    $region39: #{student_forward.1} parent=5 // pred_region
      %s595 = ssub.s32 %s9, 2
      // Predicated region
      $region41: #{student_forward.1} parent=39 // pred_check
        %p596 = pneg %p106
      $region42: #{student_forward.1} parent=39 // pred_check_branch
        %598 = sbr.rel (%p596) target = $region44
      $region43: #{student_forward.1} parent=39 // pred_region
        %s599 = smul.u32 32, %s15
        %p600 = scmp.lt.s32.totalorder %s599, 63
        %s601 = scalar_select %p600, %s599, 63
        %s602 = smul.addr %s601, 8
        %s603 = scalar_lea.vmem %s3, %s602
      $region44: #{student_forward.1} parent=39 // pred_fallthru
        _
    $region40: #{student_forward.1} parent=5 // pred_fallthru
      _
  $region6: #{student_forward.1} parent=0 // loop_footer
    %s13 = sadd.s32 1, %s9
  $region7: #{student_forward.1} parent=0 // loop_footer_branch
    %8 = sbr.rel target = $region3
  $region8: #{student_forward.1} parent=0 // loop_exit
    _

</llo_original>
